<compile_context>
chip_gen: v6e
topology: v6e:2x2x1
jax: 0.10.0
libtpu: 0.0.40
codegen_flags: <defaults>
</compile_context>

<pallas_src>
import functools
import math

import jax
import jax.numpy as jnp
from jax.experimental import pallas as pl
from jax.experimental.pallas import tpu as pltpu

LANE = 128
_TARGET_TILE_BYTES = 8 * 1024 * 1024   # ~8 MiB per patch-stream step


# ----------------------------------------------------------------------------
# Pallas kernel: patch-sum accumulate -> (last step) matmul + sigmoid + mask
# ----------------------------------------------------------------------------
def _tag_match_kernel(patches_ref,   # [tb, tg, SUB, Dg]  source dtype
                      w_ref,          # [Dg, T] f32  (tiled fused weight)
                      bias_ref,       # [1, T]  f32
                      lthr_ref,       # [1, T]  f32  logit(class threshold)
                      scores_ref,     # [tb, T] f32  (out)
                      mask_ref,       # [tb, T] int8 (out)
                      acc_ref,        # [tb, SUB, Dg] f32 scratch accumulator
                      *, inv_num_patches):
    p = pl.program_id(1)

    @pl.when(p == 0)
    def _init():
        acc_ref[...] = jnp.zeros_like(acc_ref)

    # Upcast in-kernel (stream may be bf16/uint8); accumulate in f32.
    x = patches_ref[...].astype(jnp.float32)          # [tb, tg, SUB, Dg]
    # Sublane-preserving accumulate: reduce only over the major tile-group
    # axis (whole-vreg VALU adds); the cross-sublane reduce is deferred to the
    # finalize step, off the hot loop.
    acc_ref[...] += jnp.sum(x, axis=1)                 # [tb, SUB, Dg]

    @pl.when(p == pl.num_programs(1) - 1)
    def _finalize():
        pooled = jnp.sum(acc_ref[...], axis=1) * inv_num_patches       # [tb, Dg]
        logits = jnp.dot(pooled, w_ref[...],
                         preferred_element_type=jnp.float32) + bias_ref[...]
        scores_ref[...] = jax.nn.sigmoid(logits)
        # Threshold in logit space (exact for monotone sigmoid).
        mask_ref[...] = (logits > lthr_ref[...]).astype(jnp.int8)


# ----------------------------------------------------------------------------
# Tiling helpers
# ----------------------------------------------------------------------------
def _largest_divisor(n, cap):
    cap = max(1, min(n, cap))
    for d in range(cap, 0, -1):
        if n % d == 0:
            return d
    return 1


def _pick_batch_tile(batch):
    # Output blocks are [tb, T]; tb must equal B or be a multiple of 8.
    # Prefer >=2 batch tiles so the "parallel" axis can shard across v7x's
    # two TensorCores (harmless on v5e/v6e).
    if batch <= 8:
        return batch
    best = batch
    for tb in range(8, batch // 2 + 1, 8):
        if batch % tb == 0:
            best = tb
    return best


# ----------------------------------------------------------------------------
# Wrapper
# ----------------------------------------------------------------------------
def image_tag_matching(patches, w_tiled, bias, logit_thresh, *,
                       group, tile_batch=None, tile_groups=None):
    """patches: [B, P, Din] (any real dtype); w_tiled: [Din*group, T] f32."""
    B, P, din = patches.shape
    dg = din * group
    T = w_tiled.shape[1]
    assert w_tiled.shape[0] == dg and dg % LANE == 0 and T % LANE == 0

    itemsize = jnp.dtype(patches.dtype).itemsize
    sub = max(8, 8 * (4 // itemsize))      # native sublane tile: f32->8, bf16->16, i8->32
    grp = sub * group                      # patches folded into one (sub, dg) slab

    # Remainder handling: pad P with zero patches (exact -- we still divide by
    # the true P); no-op when already aligned (real 384x384 shapes are).
    p_pad = ((P + grp - 1) // grp) * grp
    if p_pad != P:
        patches = jnp.pad(patches, ((0, 0), (0, p_pad - P), (0, 0)))
    n_groups = p_pad // grp
    # Free contiguous repack: [B, P, din] -> [B, n_groups, sub, din*group].
    packed = patches.reshape(B, n_groups, sub, dg)

    tb = _pick_batch_tile(B) if tile_batch is None else tile_batch
    assert B % tb == 0 and (tb == B or tb % 8 == 0)
    if tile_groups is None:
        row_bytes = tb * sub * dg * itemsize
        tile_groups = _largest_divisor(n_groups, _TARGET_TILE_BYTES // max(1, row_bytes))
    tg = tile_groups
    assert n_groups % tg == 0

    grid = (B // tb, n_groups // tg)
    kernel = functools.partial(_tag_match_kernel, inv_num_patches=1.0 / P)

    # Raise the scoped-VMEM limit above v5e's 16 MiB default based on the
    # actual working set (double-buffered streams); cap at 64 MiB so the same
    # sizing is valid on v7x (64 MiB/TC).
    est = (2 * tb * tg * sub * dg * itemsize          # patch stream (2 bufs)
           + 2 * (dg * T + 2 * T) * 4                 # W / bias / thr
           + tb * sub * dg * 4                        # accumulator
           + 2 * tb * T * (4 + 1))                    # scores(f32) + mask(i8)
    vmem_limit = int(min(64 * 1024 * 1024, max(32 * 1024 * 1024, 2 * est)))

    cost = pl.CostEstimate(
        flops=int(B * p_pad * din + 2 * B * dg * T),
        transcendentals=int(B * T),
        bytes_accessed=int(B * p_pad * din * itemsize
                           + dg * T * 4 + 2 * T * 4 + B * T * 5),
    )

    out_shapes = (
        jax.ShapeDtypeStruct((B, T), jnp.float32),   # per-tag scores
        jax.ShapeDtypeStruct((B, T), jnp.int8),      # tag presence mask
    )

    return pl.pallas_call(
        kernel,
        out_shape=out_shapes,
        grid=grid,
        in_specs=[
            pl.BlockSpec((tb, tg, sub, dg), lambda b, p: (b, p, 0, 0)),
            # Grid-invariant operands: constant index_map -> fetched once,
            # never re-DMA'd.
            pl.BlockSpec((dg, T), lambda b, p: (0, 0)),
            pl.BlockSpec((1, T), lambda b, p: (0, 0)),
            pl.BlockSpec((1, T), lambda b, p: (0, 0)),
        ],
        out_specs=(
            pl.BlockSpec((tb, T), lambda b, p: (b, 0)),
            pl.BlockSpec((tb, T), lambda b, p: (b, 0)),
        ),
        scratch_shapes=[pltpu.VMEM((tb, sub, dg), jnp.float32)],
        compiler_params=pltpu.CompilerParams(
            dimension_semantics=("parallel", "arbitrary"),
            vmem_limit_bytes=vmem_limit),
        cost_estimate=cost,
    )(packed, w_tiled, bias, logit_thresh)


# ----------------------------------------------------------------------------
# Glue: patchify NCHW images (dtype-preserving reshape/transpose only)
# ----------------------------------------------------------------------------
def patchify_nchw(images, patch=4):
    # [B, C, H, W] -> [B, (H/p)*(W/p), C*p*p]; dtype preserved (no f32 inflation).
    B, C, H, W = images.shape
    x = images.reshape(B, C, H // patch, patch, W // patch, patch)
    x = jnp.transpose(x, (0, 2, 4, 1, 3, 5))          # [B, Hp, Wp, C, p, p]
    return x.reshape(B, (H // patch) * (W // patch), C * patch * patch)


class ImageTagMatchingRewardModelPallas:
    """Synthetic stand-in: deterministic weights, Pallas forward."""

    def __init__(self, *, in_ch=3, patch=4, hidden=32, num_tags=128,
                 class_threshold=0.68, key=None):
        key = jax.random.PRNGKey(0) if key is None else key
        k1, k2, k3 = jax.random.split(key, 3)
        din = in_ch * patch * patch
        self.patch = patch
        self.din = din
        self.num_tags = num_tags
        assert num_tags % LANE == 0, "pad the tag vocabulary to a multiple of 128"

        # Lane packing factor: fold `g` consecutive patches into one lane-dense
        # row of width din*g = lcm(din, 128) instead of zero-padding din->128.
        self.g = LANE // math.gcd(din, LANE)

        self.w_proj = (jax.random.normal(k1, (din, hidden), jnp.float32)
                       * (1.0 / jnp.sqrt(din)))
        self.label_emb = (jax.random.normal(k2, (num_tags, hidden), jnp.float32)
                          * (1.0 / jnp.sqrt(hidden)))
        self.bias = jax.random.normal(k3, (1, num_tags), jnp.float32) * 0.01

        # Fused matching weight (projection x label embedding), tiled g times
        # so that row j of w_tiled multiplies feature (j % din) of the packed
        # patch rows (exact: all ops are linear, accumulation stays f32).
        w_comb = jnp.dot(self.w_proj, self.label_emb.T)            # [din, T]
        self.w_tiled = jnp.tile(w_comb, (self.g, 1))               # [din*g, T]

        t = jnp.full((1, num_tags), class_threshold, jnp.float32)
        self.thresh = t
        self.logit_thresh = jnp.log(t) - jnp.log1p(-t)             # logit(thresh)

    def __call__(self, images_nchw, *, input_dtype=None,
                 tile_batch=None, tile_groups=None):
        x = images_nchw if input_dtype is None else images_nchw.astype(input_dtype)
        patches = patchify_nchw(x, self.patch)        # stays in source dtype
        return image_tag_matching(patches, self.w_tiled, self.bias,
                                  self.logit_thresh, group=self.g,
                                  tile_batch=tile_batch, tile_groups=tile_groups)

    # Pure-JAX reference of the original (un-fused) math, for verification.
    def reference(self, images_nchw, *, input_dtype=None):
        x = images_nchw if input_dtype is None else images_nchw.astype(input_dtype)
        patches = patchify_nchw(x, self.patch).astype(jnp.float32)
        feats = jnp.einsum("bpi,id->bpd", patches, self.w_proj)
        pooled = jnp.mean(feats, axis=1)
        logits = jnp.dot(pooled, self.label_emb.T) + self.bias
        scores = jax.nn.sigmoid(logits)
        return scores, (scores > self.thresh).astype(jnp.int8)


if __name__ == "__main__":
    key = jax.random.PRNGKey(0)
    # Small NCHW images (the real RAM++ path uses [B, 3, 384, 384]).
    images = jax.random.normal(key, (2, 3, 64, 64), jnp.float32)

    # threshold 0.5 -> logits straddle the boundary, so the mask is non-trivial.
    model = ImageTagMatchingRewardModelPallas(class_threshold=0.5)
    T = model.num_tags

    # (1) adaptive tiles (single fused step at this size)
    s1, m1 = model(images)
    # (2) forced multi-step patch grid (exercises init / accumulate / finalize)
    s2, m2 = model(images, tile_groups=1)
    # (3) bf16 patch stream (half the HBM bytes), upcast + f32 accumulate in-kernel
    s3, m3 = model(images, input_dtype=jnp.bfloat16, tile_groups=1)
    jax.block_until_ready((s1, m1, s2, m2, s3, m3))

    for s, m in ((s1, m1), (s2, m2), (s3, m3)):
        assert s.shape == (2, T) and m.shape == (2, T)
        assert s.dtype == jnp.float32 and m.dtype == jnp.int8
        assert bool(jnp.all((s >= 0.0) & (s <= 1.0)))
        assert bool(jnp.all((m == 0) | (m == 1)))

    def check(scores, mask, ref_scores, ref_mask, rtol, atol):
        assert bool(jnp.allclose(scores, ref_scores, rtol=rtol, atol=atol))
        # Masks must agree except (possibly) within fp noise of the decision
        # boundary (documented contract: threshold compared in logit space).
        away_from_boundary = jnp.abs(ref_scores - model.thresh) > 1e-4
        assert bool(jnp.all((mask == ref_mask) | ~away_from_boundary))

    ref_s, ref_m = model.reference(images)
    check(s1, m1, ref_s, ref_m, 1e-4, 1e-5)
    check(s2, m2, ref_s, ref_m, 1e-4, 1e-5)

    ref_s_bf, ref_m_bf = model.reference(images, input_dtype=jnp.bfloat16)
    check(s3, m3, ref_s_bf, ref_m_bf, 1e-3, 1e-4)

    print("KERNEL_OK")
</pallas_src>

<mosaic_0001>
module attributes {stable_mosaic.version = 11 : i64} {
  func.func @_tag_match_kernel(%arg0: i32, %arg1: i32, %arg2: memref<2x4x8x384xf32, #tpu.memory_space<vmem>>, %arg3: memref<384x128xf32, #tpu.memory_space<vmem>>, %arg4: memref<1x128xf32, #tpu.memory_space<vmem>>, %arg5: memref<1x128xf32, #tpu.memory_space<vmem>>, %arg6: memref<2x128xf32, #tpu.memory_space<vmem>>, %arg7: memref<2x128xi8, #tpu.memory_space<vmem>>, %arg8: memref<2x8x384xf32, #tpu.memory_space<vmem>>) attributes {dimension_semantics = [#tpu.dimension_semantics<parallel>, #tpu.dimension_semantics<arbitrary>], iteration_bounds = array<i64: 1, 1>, scalar_prefetch = 0 : i64, scratch_operands = 1 : i64, tpu.core_type = #tpu.core_type<tc>, window_params = [{transform_indices = @transform_0, window_bounds = array<i64: 2, 4, 8, 384>}, {pipeline_mode = #tpu.pipeline_mode<synchronous>, transform_indices = @transform_1, window_bounds = array<i64: 384, 128>}, {pipeline_mode = #tpu.pipeline_mode<synchronous>, transform_indices = @transform_2, window_bounds = array<i64: 1, 128>}, {pipeline_mode = #tpu.pipeline_mode<synchronous>, transform_indices = @transform_3, window_bounds = array<i64: 1, 128>}, {transform_indices = @transform_4, window_bounds = array<i64: 2, 128>}, {transform_indices = @transform_5, window_bounds = array<i64: 2, 128>}]} {
    %c0_i32 = arith.constant 0 : i32
    %0 = arith.cmpi eq, %arg1, %c0_i32 : i32
    %1 = arith.extui %0 : i1 to i32
    %c0_i32_0 = arith.constant 0 : i32
    %2 = arith.cmpi ne, %1, %c0_i32_0 : i32
    scf.if %2 {
      %cst_12 = arith.constant 0.000000e+00 : f32
      %11 = vector.broadcast %cst_12 : f32 to vector<2x8x384xf32>
      %c0_13 = arith.constant 0 : index
      %c0_14 = arith.constant 0 : index
      %c0_15 = arith.constant 0 : index
      %12 = vector.load %arg8[%c0_13, %c0_14, %c0_15] : memref<2x8x384xf32, #tpu.memory_space<vmem>>, vector<2x8x384xf32>
      tpu.vector_store %arg8[%c0_13, %c0_14, %c0_15], %11 {strides = array<i32>} : memref<2x8x384xf32, #tpu.memory_space<vmem>>, vector<2x8x384xf32>,
    } else {
    }
    %c0 = arith.constant 0 : index
    %c0_1 = arith.constant 0 : index
    %c0_2 = arith.constant 0 : index
    %c0_3 = arith.constant 0 : index
    %3 = vector.load %arg2[%c0, %c0_1, %c0_2, %c0_3] : memref<2x4x8x384xf32, #tpu.memory_space<vmem>>, vector<2x4x8x384xf32>
    %c0_4 = arith.constant 0 : index
    %c0_5 = arith.constant 0 : index
    %c0_6 = arith.constant 0 : index
    %4 = vector.load %arg8[%c0_4, %c0_5, %c0_6] : memref<2x8x384xf32, #tpu.memory_space<vmem>>, vector<2x8x384xf32>
    %cst = arith.constant dense<0.000000e+00> : vector<2x8x384xf32>
    %5 = vector.multi_reduction <add>, %3, %cst [1] : vector<2x4x8x384xf32> to vector<2x8x384xf32>
    %6 = arith.addf %4, %5 : vector<2x8x384xf32>
    %c0_7 = arith.constant 0 : index
    %c0_8 = arith.constant 0 : index
    %c0_9 = arith.constant 0 : index
    %7 = vector.load %arg8[%c0_7, %c0_8, %c0_9] : memref<2x8x384xf32, #tpu.memory_space<vmem>>, vector<2x8x384xf32>
    tpu.vector_store %arg8[%c0_7, %c0_8, %c0_9], %6 {strides = array<i32>} : memref<2x8x384xf32, #tpu.memory_space<vmem>>, vector<2x8x384xf32>,
    %c0_i32_10 = arith.constant 0 : i32
    %8 = arith.cmpi eq, %arg1, %c0_i32_10 : i32
    %9 = arith.extui %8 : i1 to i32
    %c0_i32_11 = arith.constant 0 : i32
    %10 = arith.cmpi ne, %9, %c0_i32_11 : i32
    scf.if %10 {
      %c0_12 = arith.constant 0 : index
      %c0_13 = arith.constant 0 : index
      %c0_14 = arith.constant 0 : index
      %11 = vector.load %arg8[%c0_12, %c0_13, %c0_14] : memref<2x8x384xf32, #tpu.memory_space<vmem>>, vector<2x8x384xf32>
      %cst_15 = arith.constant dense<0.000000e+00> : vector<2x384xf32>
      %12 = vector.multi_reduction <add>, %11, %cst_15 [1] : vector<2x8x384xf32> to vector<2x384xf32>
      %cst_16 = arith.constant 3.906250e-03 : f32
      %13 = vector.broadcast %cst_16 : f32 to vector<2x384xf32>
      %14 = arith.mulf %12, %13 : vector<2x384xf32>
      %c0_17 = arith.constant 0 : index
      %c0_18 = arith.constant 0 : index
      %15 = vector.load %arg3[%c0_17, %c0_18] : memref<384x128xf32, #tpu.memory_space<vmem>>, vector<384x128xf32>
      %cst_19 = arith.constant dense<0.000000e+00> : vector<2x128xf32>
      %16 = tpu.matmul %14, %15, %cst_19 {dimension_numbers = #tpu.dot_dimension_numbers<[1], [0], [0], [1], [0, 0, 1, 1], [], []>} : vector<2x384xf32>, vector<384x128xf32>, vector<2x128xf32> -> vector<2x128xf32>
      %c0_20 = arith.constant 0 : index
      %c0_21 = arith.constant 0 : index
      %17 = vector.load %arg4[%c0_20, %c0_21] : memref<1x128xf32, #tpu.memory_space<vmem>>, vector<1x128xf32>
      %18 = vector.broadcast %17 : vector<1x128xf32> to vector<2x128xf32>
      %19 = arith.addf %16, %18 : vector<2x128xf32>
      %20 = arith.negf %19 : vector<2x128xf32>
      %21 = math.exp %20 : vector<2x128xf32>
      %cst_22 = arith.constant 1.000000e+00 : f32
      %22 = vector.broadcast %cst_22 : f32 to vector<2x128xf32>
      %23 = arith.addf %22, %21 : vector<2x128xf32>
      %24 = arith.divf %22, %23 : vector<2x128xf32>
      %c0_23 = arith.constant 0 : index
      %c0_24 = arith.constant 0 : index
      %25 = vector.load %arg6[%c0_23, %c0_24] : memref<2x128xf32, #tpu.memory_space<vmem>>, vector<2x128xf32>
      tpu.vector_store %arg6[%c0_23, %c0_24], %24 {strides = array<i32>} : memref<2x128xf32, #tpu.memory_space<vmem>>, vector<2x128xf32>,
      %c0_25 = arith.constant 0 : index
      %c0_26 = arith.constant 0 : index
      %26 = vector.load %arg5[%c0_25, %c0_26] : memref<1x128xf32, #tpu.memory_space<vmem>>, vector<1x128xf32>
      %27 = vector.broadcast %26 : vector<1x128xf32> to vector<2x128xf32>
      %28 = arith.cmpf ogt, %19, %27 : vector<2x128xf32>
      %29 = arith.extui %28 : vector<2x128xi1> to vector<2x128xi8>
      %c0_27 = arith.constant 0 : index
      %c0_28 = arith.constant 0 : index
      %30 = vector.load %arg7[%c0_27, %c0_28] : memref<2x128xi8, #tpu.memory_space<vmem>>, vector<2x128xi8>
      tpu.vector_store %arg7[%c0_27, %c0_28], %29 {strides = array<i32>} : memref<2x128xi8, #tpu.memory_space<vmem>>, vector<2x128xi8>,
    } else {
    }
    return
  }
  func.func @transform_0(%arg0: i32, %arg1: i32) -> (i32, i32, i32, i32) {
    %c0_i32 = arith.constant 0 : i32
    %c0_i32_0 = arith.constant 0 : i32
    %c0_i32_1 = arith.constant 0 : i32
    return %arg0, %arg1, %c0_i32, %c0_i32_0 : i32, i32, i32, i32
  }
  func.func @transform_1(%arg0: i32, %arg1: i32) -> (i32, i32) {
    %c0_i32 = arith.constant 0 : i32
    %c0_i32_0 = arith.constant 0 : i32
    %c0_i32_1 = arith.constant 0 : i32
    return %c0_i32, %c0_i32_0 : i32, i32
  }
  func.func @transform_2(%arg0: i32, %arg1: i32) -> (i32, i32) {
    %c0_i32 = arith.constant 0 : i32
    %c0_i32_0 = arith.constant 0 : i32
    %c0_i32_1 = arith.constant 0 : i32
    return %c0_i32, %c0_i32_0 : i32, i32
  }
  func.func @transform_3(%arg0: i32, %arg1: i32) -> (i32, i32) {
    %c0_i32 = arith.constant 0 : i32
    %c0_i32_0 = arith.constant 0 : i32
    %c0_i32_1 = arith.constant 0 : i32
    return %c0_i32, %c0_i32_0 : i32, i32
  }
  func.func @transform_4(%arg0: i32, %arg1: i32) -> (i32, i32) {
    %c0_i32 = arith.constant 0 : i32
    %c0_i32_0 = arith.constant 0 : i32
    return %arg0, %c0_i32 : i32, i32
  }
  func.func @transform_5(%arg0: i32, %arg1: i32) -> (i32, i32) {
    %c0_i32 = arith.constant 0 : i32
    %c0_i32_0 = arith.constant 0 : i32
    return %arg0, %c0_i32 : i32, i32
  }
}

</mosaic_0001>

<llo_original>
// kernel: tpu_custom_call.1
$region0: #{tpu_custom_call.1}
  #allocation0 [shape = 'u32[]', space=smem, size = 0x4, offset = 0x4, fixed_abs, tag = 'smem constant byte address 0x4 - core index']
  #allocation1 [shape = 'u32[144,128]{1,0:T(1,128)}', space=vmem, size = 0x12000, scoped, tag = 'internal scratch']
  #allocation2 [shape = 'f32[2,8,384]{2,1,0:T(8,128)}', space=vmem, size = 0x6000, scoped, tag = 'scratch operand']
  %s0 = inlined_call_operand.hbm [shape: f32[2,4,8,384], index: 0, kind: input, shape index: {}]
  %s1 = inlined_call_operand.hbm [shape: f32[384,128], index: 1, kind: input, shape index: {}]
  %s2 = inlined_call_operand.vmem [shape: f32[1,128], index: 2, kind: input, shape index: {}]
  %s3 = inlined_call_operand.vmem [shape: f32[1,128], index: 3, kind: input, shape index: {}]
  %s4 = inlined_call_operand.hbm [shape: f32[2,128], index: 4, kind: output, shape index: {0}]
  %s5 = inlined_call_operand.hbm [shape: s8[2,128], index: 5, kind: output, shape index: {1}]
  %6 = xla_tuple %s4, %s5
  %s7 = sld [smem:[#allocation0]]
  $region50: #{tpu_custom_call.1} parent=0
    _
  %s9 = ssub.s32 1, %s7
  %s10 = scalar_select 0, %s9, %s7
  $region1: #{tpu_custom_call.1} parent=0
    #allocation3 [shape = 'u8[98304]{0}', space=vmem, size = 0x18000, scoped, tag = 'input window, operand 0, single buffered']
    #allocation4 [shape = 's32[1]{0}', space=sflag, size = 0x4, scoped, tag = 'scoped memory for tpu_custom_call.1']
    #allocation5 [shape = 's32[1]{0}', space=sflag, size = 0x4, scoped, tag = 'scoped memory for tpu_custom_call.1']
    #allocation6 [shape = 'u8[196608]{0}', space=vmem, size = 0x30000, scoped, tag = 'input window, operand 1, single buffered']
    #allocation7 [shape = 's32[1]{0}', space=sflag, size = 0x4, scoped, tag = 'scoped memory for tpu_custom_call.1']
    #allocation8 [shape = 'u8[1024]{0}', space=vmem, size = 0x400, scoped, tag = 'output window, operand 0, single buffered']
    #allocation9 [shape = 'u8[512]{0}', space=vmem, size = 0x400, scoped, tag = 'output window, operand 1, single buffered']
    #allocation10 [shape = 's32[1]{0}', space=sflag, size = 0x4, scoped, tag = 'scoped memory for tpu_custom_call.1']
    %11 = vsyncpa [#allocation4], 0
    %12 = vsyncpa [#allocation7], 0
    %13 = vsyncpa [#allocation5], 0
    %14 = vsyncpa [#allocation10], 0
    // Predicated region
    $region2: #{tpu_custom_call.1} parent=1 // pred_check
      _
    $region3: #{tpu_custom_call.1} parent=1 // pred_check_branch
      %16 = sbr.rel (0) target = $region5
    $region4: #{tpu_custom_call.1} parent=1 // pred_region
      %s18 = ssub.s32 3072, 3072
      %19 = vsyncadd [#allocation4], %s18
      %s20 = sshll.u32 [#allocation3], 4
      %s21 = int_to_ptr.vmem [resolvable:$true] %s20
      %26 = dma.hbm_to_vmem [thread:$0]  %s0, 3072, %s21, [#allocation4], 384, 384, 24
    $region5: #{tpu_custom_call.1} parent=1 // pred_fallthru
      _
    // Predicated region
    $region6: #{tpu_custom_call.1} parent=1 // pred_check
      _
    $region7: #{tpu_custom_call.1} parent=1 // pred_check_branch
      %28 = sbr.rel (0) target = $region9
    $region8: #{tpu_custom_call.1} parent=1 // pred_region
      %s30 = ssub.s32 6144, 6144
      %31 = vsyncadd [#allocation7], %s30
      %s32 = sshll.u32 [#allocation6], 4
      %s33 = int_to_ptr.vmem [resolvable:$true] %s32
      %38 = dma.hbm_to_vmem [thread:$0]  %s1, 6144, %s33, [#allocation7], 128, 128, 8
    $region9: #{tpu_custom_call.1} parent=1 // pred_fallthru
      _
    // Predicated region
    $region10: #{tpu_custom_call.1} parent=1 // pred_check
      _
    $region11: #{tpu_custom_call.1} parent=1 // pred_check_branch
      %40 = sbr.rel (0) target = $region13
    $region12: #{tpu_custom_call.1} parent=1 // pred_region
      _
    $region13: #{tpu_custom_call.1} parent=1 // pred_fallthru
      _
    // Predicated region
    $region14: #{tpu_custom_call.1} parent=1 // pred_check
      _
    $region15: #{tpu_custom_call.1} parent=1 // pred_check_branch
      %42 = sbr.rel (0) target = $region17
    $region16: #{tpu_custom_call.1} parent=1 // pred_region
      _
    $region17: #{tpu_custom_call.1} parent=1 // pred_fallthru
      _
    // Predicated region
    $region18: #{tpu_custom_call.1} parent=1 // pred_check
      _
    $region19: #{tpu_custom_call.1} parent=1 // pred_check_branch
      %44 = sbr.rel (0) target = $region21
    $region20: #{tpu_custom_call.1} parent=1 // pred_region
      %45 = dma.done [#allocation4], 3072
    $region21: #{tpu_custom_call.1} parent=1 // pred_fallthru
      _
    // Predicated region
    $region22: #{tpu_custom_call.1} parent=1 // pred_check
      _
    $region23: #{tpu_custom_call.1} parent=1 // pred_check_branch
      %47 = sbr.rel (0) target = $region25
    $region24: #{tpu_custom_call.1} parent=1 // pred_region
      %48 = dma.done [#allocation7], 6144
    $region25: #{tpu_custom_call.1} parent=1 // pred_fallthru
      _
    %p51 = scmp.eq.s32.totalorder 0, 0
    // Predicated region
    $region26: #{tpu_custom_call.1} parent=1 // pred_check
      %p52 = pneg %p51
    $region27: #{tpu_custom_call.1} parent=1 // pred_check_branch
      %54 = sbr.rel (%p52) target = $region29
    $region28: #{tpu_custom_call.1} parent=1 // pred_region
      %55 = vst [vmem:[#allocation2] sm:$0xff] 0.0
      %56 = vst [vmem:[#allocation2 + $0x8] sm:$0xff] 0.0
      %57 = vst [vmem:[#allocation2 + $0x10] sm:$0xff] 0.0
      %58 = vst [vmem:[#allocation2 + $0x18] sm:$0xff] 0.0
      %59 = vst [vmem:[#allocation2 + $0x20] sm:$0xff] 0.0
      %60 = vst [vmem:[#allocation2 + $0x28] sm:$0xff] 0.0
    $region29: #{tpu_custom_call.1} parent=1 // pred_fallthru
      _
    %v61 = vld [vmem:[#allocation3] sm:$0xff]
    %v62 = vld [vmem:[#allocation3 + $0x8] sm:$0xff]
    %v63 = vld [vmem:[#allocation3 + $0x10] sm:$0xff]
    %v64 = vld [vmem:[#allocation3 + $0x18] sm:$0xff]
    %v65 = vld [vmem:[#allocation3 + $0x20] sm:$0xff]
    %v66 = vld [vmem:[#allocation3 + $0x28] sm:$0xff]
    %v67 = vld [vmem:[#allocation3 + $0x30] sm:$0xff]
    %v68 = vld [vmem:[#allocation3 + $0x38] sm:$0xff]
    %v69 = vld [vmem:[#allocation3 + $0x40] sm:$0xff]
    %v70 = vld [vmem:[#allocation3 + $0x48] sm:$0xff]
    %v71 = vld [vmem:[#allocation3 + $0x50] sm:$0xff]
    %v72 = vld [vmem:[#allocation3 + $0x58] sm:$0xff]
    %v73 = vld [vmem:[#allocation3 + $0x60] sm:$0xff]
    %v74 = vld [vmem:[#allocation3 + $0x68] sm:$0xff]
    %v75 = vld [vmem:[#allocation3 + $0x70] sm:$0xff]
    %v76 = vld [vmem:[#allocation3 + $0x78] sm:$0xff]
    %v77 = vld [vmem:[#allocation3 + $0x80] sm:$0xff]
    %v78 = vld [vmem:[#allocation3 + $0x88] sm:$0xff]
    %v79 = vld [vmem:[#allocation3 + $0x90] sm:$0xff]
    %v80 = vld [vmem:[#allocation3 + $0x98] sm:$0xff]
    %v81 = vld [vmem:[#allocation3 + $0xa0] sm:$0xff]
    %v82 = vld [vmem:[#allocation3 + $0xa8] sm:$0xff]
    %v83 = vld [vmem:[#allocation3 + $0xb0] sm:$0xff]
    %v84 = vld [vmem:[#allocation3 + $0xb8] sm:$0xff]
    %v85 = vld [vmem:[#allocation2] sm:$0xff]
    %v86 = vld [vmem:[#allocation2 + $0x8] sm:$0xff]
    %v87 = vld [vmem:[#allocation2 + $0x10] sm:$0xff]
    %v88 = vld [vmem:[#allocation2 + $0x18] sm:$0xff]
    %v89 = vld [vmem:[#allocation2 + $0x20] sm:$0xff]
    %v90 = vld [vmem:[#allocation2 + $0x28] sm:$0xff]
    %v91 = vadd.f32 %v61, %v64
    %v92 = vadd.f32 %v91, %v67
    %v93 = vadd.f32 %v92, %v70
    %v94 = vadd.f32 %v62, %v65
    %v95 = vadd.f32 %v94, %v68
    %v96 = vadd.f32 %v95, %v71
    %v97 = vadd.f32 %v63, %v66
    %v98 = vadd.f32 %v97, %v69
    %v99 = vadd.f32 %v98, %v72
    %v100 = vadd.f32 %v73, %v76
    %v101 = vadd.f32 %v100, %v79
    %v102 = vadd.f32 %v101, %v82
    %v103 = vadd.f32 %v74, %v77
    %v104 = vadd.f32 %v103, %v80
    %v105 = vadd.f32 %v104, %v83
    %v106 = vadd.f32 %v75, %v78
    %v107 = vadd.f32 %v106, %v81
    %v108 = vadd.f32 %v107, %v84
    %v109 = vadd.f32 %v85, %v93
    %v110 = vadd.f32 %v86, %v96
    %v111 = vadd.f32 %v87, %v99
    %v112 = vadd.f32 %v88, %v102
    %v113 = vadd.f32 %v89, %v105
    %v114 = vadd.f32 %v90, %v108
    %115 = vst [vmem:[#allocation2] sm:$0xff] %v109
    %116 = vst [vmem:[#allocation2 + $0x8] sm:$0xff] %v110
    %117 = vst [vmem:[#allocation2 + $0x10] sm:$0xff] %v111
    %118 = vst [vmem:[#allocation2 + $0x18] sm:$0xff] %v112
    %119 = vst [vmem:[#allocation2 + $0x20] sm:$0xff] %v113
    %120 = vst [vmem:[#allocation2 + $0x28] sm:$0xff] %v114
    // Predicated region
    $region30: #{tpu_custom_call.1} parent=1 // pred_check
      %p121 = pneg %p51
    $region31: #{tpu_custom_call.1} parent=1 // pred_check_branch
      %123 = sbr.rel (%p121) target = $region33
    $region32: #{tpu_custom_call.1} parent=1 // pred_region
      %v124 = vld [vmem:[#allocation2] sm:$0xff]
      %v125 = vld [vmem:[#allocation2 + $0x8] sm:$0xff]
      %v126 = vld [vmem:[#allocation2 + $0x10] sm:$0xff]
      %v127 = vld [vmem:[#allocation2 + $0x18] sm:$0xff]
      %v128 = vld [vmem:[#allocation2 + $0x20] sm:$0xff]
      %v129 = vld [vmem:[#allocation2 + $0x28] sm:$0xff]
      %v130 = vrot.slane %v124, 4
      %v131 = vadd.f32 %v124, %v130
      %v132 = vrot.slane %v131, 2
      %v133 = vadd.f32 %v131, %v132
      %v134 = vrot.slane %v133, 1
      %v135 = vadd.f32 %v133, %v134
      %v136 = vrot.slane %v125, 4
      %v137 = vadd.f32 %v125, %v136
      %v138 = vrot.slane %v137, 2
      %v139 = vadd.f32 %v137, %v138
      %v140 = vrot.slane %v139, 1
      %v141 = vadd.f32 %v139, %v140
      %v142 = vrot.slane %v126, 4
      %v143 = vadd.f32 %v126, %v142
      %v144 = vrot.slane %v143, 2
      %v145 = vadd.f32 %v143, %v144
      %v146 = vrot.slane %v145, 1
      %v147 = vadd.f32 %v145, %v146
      %v148 = vrot.slane %v127, 4
      %v149 = vadd.f32 %v127, %v148
      %v150 = vrot.slane %v149, 2
      %v151 = vadd.f32 %v149, %v150
      %v152 = vrot.slane %v151, 1
      %v153 = vadd.f32 %v151, %v152
      %v154 = vrot.slane %v128, 4
      %v155 = vadd.f32 %v128, %v154
      %v156 = vrot.slane %v155, 2
      %v157 = vadd.f32 %v155, %v156
      %v158 = vrot.slane %v157, 1
      %v159 = vadd.f32 %v157, %v158
      %v160 = vrot.slane %v129, 4
      %v161 = vadd.f32 %v129, %v160
      %v162 = vrot.slane %v161, 2
      %v163 = vadd.f32 %v161, %v162
      %v164 = vrot.slane %v163, 1
      %v165 = vadd.f32 %v163, %v164
      %v166 = vmul.f32 %v135, 0.00390625
      %v167 = vmul.f32 %v141, 0.00390625
      %v168 = vmul.f32 %v147, 0.00390625
      %v169 = vmul.f32 %v153, 0.00390625
      %v170 = vmul.f32 %v159, 0.00390625
      %v171 = vmul.f32 %v165, 0.00390625
      %v172 = vld [vmem:[#allocation6] sm:$0xff]
      %v173 = vld [vmem:[#allocation6 + $0x8] sm:$0xff]
      %v174 = vld [vmem:[#allocation6 + $0x10] sm:$0xff]
      %v175 = vld [vmem:[#allocation6 + $0x18] sm:$0xff]
      %v176 = vld [vmem:[#allocation6 + $0x20] sm:$0xff]
      %v177 = vld [vmem:[#allocation6 + $0x28] sm:$0xff]
      %v178 = vld [vmem:[#allocation6 + $0x30] sm:$0xff]
      %v179 = vld [vmem:[#allocation6 + $0x38] sm:$0xff]
      %v180 = vld [vmem:[#allocation6 + $0x40] sm:$0xff]
      %v181 = vld [vmem:[#allocation6 + $0x48] sm:$0xff]
      %v182 = vld [vmem:[#allocation6 + $0x50] sm:$0xff]
      %v183 = vld [vmem:[#allocation6 + $0x58] sm:$0xff]
      %v184 = vld [vmem:[#allocation6 + $0x60] sm:$0xff]
      %v185 = vld [vmem:[#allocation6 + $0x68] sm:$0xff]
      %v186 = vld [vmem:[#allocation6 + $0x70] sm:$0xff]
      %v187 = vld [vmem:[#allocation6 + $0x78] sm:$0xff]
      %v188 = vld [vmem:[#allocation6 + $0x80] sm:$0xff]
      %v189 = vld [vmem:[#allocation6 + $0x88] sm:$0xff]
      %v190 = vld [vmem:[#allocation6 + $0x90] sm:$0xff]
      %v191 = vld [vmem:[#allocation6 + $0x98] sm:$0xff]
      %v192 = vld [vmem:[#allocation6 + $0xa0] sm:$0xff]
      %v193 = vld [vmem:[#allocation6 + $0xa8] sm:$0xff]
      %v194 = vld [vmem:[#allocation6 + $0xb0] sm:$0xff]
      %v195 = vld [vmem:[#allocation6 + $0xb8] sm:$0xff]
      %v196 = vld [vmem:[#allocation6 + $0xc0] sm:$0xff]
      %v197 = vld [vmem:[#allocation6 + $0xc8] sm:$0xff]
      %v198 = vld [vmem:[#allocation6 + $0xd0] sm:$0xff]
      %v199 = vld [vmem:[#allocation6 + $0xd8] sm:$0xff]
      %v200 = vld [vmem:[#allocation6 + $0xe0] sm:$0xff]
      %v201 = vld [vmem:[#allocation6 + $0xe8] sm:$0xff]
      %v202 = vld [vmem:[#allocation6 + $0xf0] sm:$0xff]
      %v203 = vld [vmem:[#allocation6 + $0xf8] sm:$0xff]
      %v204 = vld [vmem:[#allocation6 + $0x100] sm:$0xff]
      %v205 = vld [vmem:[#allocation6 + $0x108] sm:$0xff]
      %v206 = vld [vmem:[#allocation6 + $0x110] sm:$0xff]
      %v207 = vld [vmem:[#allocation6 + $0x118] sm:$0xff]
      %v208 = vld [vmem:[#allocation6 + $0x120] sm:$0xff]
      %v209 = vld [vmem:[#allocation6 + $0x128] sm:$0xff]
      %v210 = vld [vmem:[#allocation6 + $0x130] sm:$0xff]
      %v211 = vld [vmem:[#allocation6 + $0x138] sm:$0xff]
      %v212 = vld [vmem:[#allocation6 + $0x140] sm:$0xff]
      %v213 = vld [vmem:[#allocation6 + $0x148] sm:$0xff]
      %v214 = vld [vmem:[#allocation6 + $0x150] sm:$0xff]
      %v215 = vld [vmem:[#allocation6 + $0x158] sm:$0xff]
      %v216 = vld [vmem:[#allocation6 + $0x160] sm:$0xff]
      %v217 = vld [vmem:[#allocation6 + $0x168] sm:$0xff]
      %v218 = vld [vmem:[#allocation6 + $0x170] sm:$0xff]
      %v219 = vld [vmem:[#allocation6 + $0x178] sm:$0xff]
      %v220 = vld [vmem:[%s2] sm:$0x1]
      %v222 = vlaneseq
      %v223 = vshrl.u32 %v222, 7
      %v224 = vsub.s32 0, %v223
      %v225 = vrot.slane %v220, %v224
      %vm233 = vcmask 1041409
      %v234 = vsel %vm233, %v169, %v166
      %v235 = vsel %vm233, %v170, %v167
      %v236 = vsel %vm233, %v171, %v168
      %240 = vmatprep.subr.mxu0 0.0
      %241 = vmatpush1.msra.mxu0 %v187
      %242 = vmatprep.subr.mxu0 0.0
      %243 = vmatpush1.msra.mxu0 %v186
      %244 = vmatprep.subr.mxu0 0.0
      %245 = vmatpush1.msra.mxu0 %v185
      %246 = vmatprep.subr.mxu0 0.0
      %247 = vmatpush1.msra.mxu0 %v184
      %248 = vmatprep.subr.mxu0 0.0
      %249 = vmatpush1.msra.mxu0 %v183
      %250 = vmatprep.subr.mxu0 0.0
      %251 = vmatpush1.msra.mxu0 %v182
      %252 = vmatprep.subr.mxu0 0.0
      %253 = vmatpush1.msra.mxu0 %v181
      %254 = vmatprep.subr.mxu0 0.0
      %255 = vmatpush1.msra.mxu0 %v180
      %256 = vmatprep.subr.mxu0 0.0
      %257 = vmatpush1.msra.mxu0 %v179
      %258 = vmatprep.subr.mxu0 0.0
      %259 = vmatpush1.msra.mxu0 %v178
      %260 = vmatprep.subr.mxu0 0.0
      %261 = vmatpush1.msra.mxu0 %v177
      %262 = vmatprep.subr.mxu0 0.0
      %263 = vmatpush1.msra.mxu0 %v176
      %264 = vmatprep.subr.mxu0 0.0
      %265 = vmatpush1.msra.mxu0 %v175
      %266 = vmatprep.subr.mxu0 0.0
      %267 = vmatpush1.msra.mxu0 %v174
      %268 = vmatprep.subr.mxu0 0.0
      %269 = vmatpush1.msra.mxu0 %v173
      %270 = vmatprep.subr.mxu0 0.0
      %271 = vmatpush1.msra.mxu0 %v172
      %272 = vmatprep.subr.mxu0 0.0
      %273 = vmatpush2.msra.mxu0 %v203
      %274 = vmatprep.subr.mxu0 0.0
      %275 = vmatpush2.msra.mxu0 %v202
      %276 = vmatprep.subr.mxu0 0.0
      %277 = vmatpush2.msra.mxu0 %v201
      %278 = vmatprep.subr.mxu0 0.0
      %279 = vmatpush2.msra.mxu0 %v200
      %280 = vmatprep.subr.mxu0 0.0
      %281 = vmatpush2.msra.mxu0 %v199
      %282 = vmatprep.subr.mxu0 0.0
      %283 = vmatpush2.msra.mxu0 %v198
      %284 = vmatprep.subr.mxu0 0.0
      %285 = vmatpush2.msra.mxu0 %v197
      %286 = vmatprep.subr.mxu0 0.0
      %287 = vmatpush2.msra.mxu0 %v196
      %288 = vmatprep.subr.mxu0 0.0
      %289 = vmatpush2.msra.mxu0 %v195
      %290 = vmatprep.subr.mxu0 0.0
      %291 = vmatpush2.msra.mxu0 %v194
      %292 = vmatprep.subr.mxu0 0.0
      %293 = vmatpush2.msra.mxu0 %v193
      %294 = vmatprep.subr.mxu0 0.0
      %295 = vmatpush2.msra.mxu0 %v192
      %296 = vmatprep.subr.mxu0 0.0
      %297 = vmatpush2.msra.mxu0 %v191
      %298 = vmatprep.subr.mxu0 0.0
      %299 = vmatpush2.msra.mxu0 %v190
      %300 = vmatprep.subr.mxu0 0.0
      %301 = vmatpush2.msra.mxu0 %v189
      %302 = vmatprep.subr.mxu0 0.0
      %303 = vmatpush2.msra.mxu0 %v188
      %304 = vmatprep.mubr.f32.mxu0 %v235
      %305 = vmatmul.mubr.f32.gmra.mxu0 %v234
      %v306 = vpop.f32.mrf.mxu0
      %v307 = vadd.f32 %v225, %v306
      %v308 = vpop.f32.mrf.mxu0
      %309 = vdwg.mxu0
      %310 = vmatprep.subr.mxu0 0.0
      %311 = vmatpush1.msra.mxu0 %v219
      %312 = vmatprep.subr.mxu0 0.0
      %313 = vmatpush1.msra.mxu0 %v218
      %314 = vmatprep.subr.mxu0 0.0
      %315 = vmatpush1.msra.mxu0 %v217
      %316 = vmatprep.subr.mxu0 0.0
      %317 = vmatpush1.msra.mxu0 %v216
      %318 = vmatprep.subr.mxu0 0.0
      %319 = vmatpush1.msra.mxu0 %v215
      %320 = vmatprep.subr.mxu0 0.0
      %321 = vmatpush1.msra.mxu0 %v214
      %322 = vmatprep.subr.mxu0 0.0
      %323 = vmatpush1.msra.mxu0 %v213
      %324 = vmatprep.subr.mxu0 0.0
      %325 = vmatpush1.msra.mxu0 %v212
      %326 = vmatprep.subr.mxu0 0.0
      %327 = vmatpush1.msra.mxu0 %v211
      %328 = vmatprep.subr.mxu0 0.0
      %329 = vmatpush1.msra.mxu0 %v210
      %330 = vmatprep.subr.mxu0 0.0
      %331 = vmatpush1.msra.mxu0 %v209
      %332 = vmatprep.subr.mxu0 0.0
      %333 = vmatpush1.msra.mxu0 %v208
      %334 = vmatprep.subr.mxu0 0.0
      %335 = vmatpush1.msra.mxu0 %v207
      %336 = vmatprep.subr.mxu0 0.0
      %337 = vmatpush1.msra.mxu0 %v206
      %338 = vmatprep.subr.mxu0 0.0
      %339 = vmatpush1.msra.mxu0 %v205
      %340 = vmatprep.subr.mxu0 0.0
      %341 = vmatpush1.msra.mxu0 %v204
      %342 = vmatprep.subr.mxu0 0.0
      %343 = vmatpush2.msra.mxu0 0.0
      %344 = vmatprep.subr.mxu0 0.0
      %345 = vmatpush2.msra.mxu0 0.0
      %346 = vmatprep.subr.mxu0 0.0
      %347 = vmatpush2.msra.mxu0 0.0
      %348 = vmatprep.subr.mxu0 0.0
      %349 = vmatpush2.msra.mxu0 0.0
      %350 = vmatprep.subr.mxu0 0.0
      %351 = vmatpush2.msra.mxu0 0.0
      %352 = vmatprep.subr.mxu0 0.0
      %353 = vmatpush2.msra.mxu0 0.0
      %354 = vmatprep.subr.mxu0 0.0
      %355 = vmatpush2.msra.mxu0 0.0
      %356 = vmatprep.subr.mxu0 0.0
      %357 = vmatpush2.msra.mxu0 0.0
      %358 = vmatprep.subr.mxu0 0.0
      %359 = vmatpush2.msra.mxu0 0.0
      %360 = vmatprep.subr.mxu0 0.0
      %361 = vmatpush2.msra.mxu0 0.0
      %362 = vmatprep.subr.mxu0 0.0
      %363 = vmatpush2.msra.mxu0 0.0
      %364 = vmatprep.subr.mxu0 0.0
      %365 = vmatpush2.msra.mxu0 0.0
      %366 = vmatprep.subr.mxu0 0.0
      %367 = vmatpush2.msra.mxu0 0.0
      %368 = vmatprep.subr.mxu0 0.0
      %369 = vmatpush2.msra.mxu0 0.0
      %370 = vmatprep.subr.mxu0 0.0
      %371 = vmatpush2.msra.mxu0 0.0
      %372 = vmatprep.subr.mxu0 0.0
      %373 = vmatpush2.msra.mxu0 0.0
      %374 = vmatprep.mubr.f32.mxu0 0.0
      %375 = vmatmul.mubr.f32.gmra.mxu0 %v236
      %v376 = vpop.f32.mrf.mxu0
      %v377 = vadd.f32 %v307, %v376
      %v378 = vpop.f32.mrf.mxu0
      %379 = vdwg.mxu0
      %v380 = vxor.u32 %v377, 2147483648
      %v381 = vmul.f32 %v380, 1.442695
      %v382 = vpow.pop %v381
      %v383 = vadd.f32 %v382, 1.0
      %v384 = vrcp.pop %v383
      %v385 = vmul.f32 1.0, %v384
      %386 = vst [vmem:[#allocation8] sm:$0x3] %v385
      %v387 = vld [vmem:[%s3] sm:$0x1]
      %v389 = vlaneseq
      %v390 = vshrl.u32 %v389, 7
      %v391 = vsub.s32 0, %v390
      %v392 = vrot.slane %v387, %v391
      %vm394 = vcmp.gt.f32.partialorder %v377, %v392
      %vm395 = vmpackc.low %vm394, %vm394
      %vm396 = vmpackc.even %vm395, %vm395
      %v397 = vsel %vm396, 16843009, 0
      %vm398 = vcmask 1040384
      %vm399 = vsmask.f32 256
      %vm400 = vmand %vm398, %vm399
      %v401 = vld [vmem:[#allocation9] sm:$0x1]
      %v402 = vsel %vm400, %v397, %v401
      %403 = vst [vmem:[#allocation9] sm:$0x1] %v402
    $region33: #{tpu_custom_call.1} parent=1 // pred_fallthru
      _
    // Predicated region
    $region34: #{tpu_custom_call.1} parent=1 // pred_check
      _
    $region35: #{tpu_custom_call.1} parent=1 // pred_check_branch
      %405 = sbr.rel (0) target = $region37
    $region36: #{tpu_custom_call.1} parent=1 // pred_region
      %s407 = ssub.s32 32, 32
      %408 = vsyncadd [#allocation5], %s407
      %s410 = sshll.u32 [#allocation8], 4
      %s411 = int_to_ptr.vmem [resolvable:$true] %s410
      %413 = dma.vmem_to_hbm [thread:$0]  %s411, 32, %s4, [#allocation5]
    $region37: #{tpu_custom_call.1} parent=1 // pred_fallthru
      _
    // Predicated region
    $region38: #{tpu_custom_call.1} parent=1 // pred_check
      _
    $region39: #{tpu_custom_call.1} parent=1 // pred_check_branch
      %415 = sbr.rel (0) target = $region41
    $region40: #{tpu_custom_call.1} parent=1 // pred_region
      %s417 = ssub.s32 16, 16
      %418 = vsyncadd [#allocation10], %s417
      %s420 = sshll.u32 [#allocation9], 4
      %s421 = int_to_ptr.vmem [resolvable:$true] %s420
      %423 = dma.vmem_to_hbm [thread:$0]  %s421, 16, %s5, [#allocation10]
    $region41: #{tpu_custom_call.1} parent=1 // pred_fallthru
      _
    // Predicated region
    $region42: #{tpu_custom_call.1} parent=1 // pred_check
      _
    $region43: #{tpu_custom_call.1} parent=1 // pred_check_branch
      %425 = sbr.rel (0) target = $region45
    $region44: #{tpu_custom_call.1} parent=1 // pred_region
      %426 = dma.done [#allocation5], 32
    $region45: #{tpu_custom_call.1} parent=1 // pred_fallthru
      _
    // Predicated region
    $region46: #{tpu_custom_call.1} parent=1 // pred_check
      _
    $region47: #{tpu_custom_call.1} parent=1 // pred_check_branch
      %428 = sbr.rel (0) target = $region49
    $region48: #{tpu_custom_call.1} parent=1 // pred_region
      %429 = dma.done [#allocation10], 16
    $region49: #{tpu_custom_call.1} parent=1 // pred_fallthru
      _
    %430 = vsyncpa [#allocation4], 1
    %431 = vsyncpa [#allocation7], 1
    %432 = vsyncpa [#allocation5], 1
    %433 = vsyncpa [#allocation10], 1

</llo_original>
